<compile_context>
chip_gen: v6e
topology: v6e:2x2x1
jax: 0.10.0
libtpu: 0.0.40
codegen_flags: <defaults>
</compile_context>

<pallas_src>
import jax
import jax.numpy as jnp
from jax.experimental import pallas as pl
from jax.experimental.pallas import tpu as pltpu


def mlp_kernel(x_ref, w1_ref, b1_ref, w2_ref, b2_ref, o_ref):
    # First linear layer (MXU, f32 accumulation) + bias + ReLU in f32 on the VPU.
    h = jnp.dot(x_ref[...], w1_ref[...], preferred_element_type=jnp.float32)
    h = jnp.maximum(h + b1_ref[...], 0.0)
    # Second linear layer: downcast the f32 activations to the weight compute dtype
    # (documented precision tradeoff when compute_dtype=bf16), accumulate in f32.
    y = jnp.dot(h.astype(w2_ref.dtype), w2_ref[...],
                preferred_element_type=jnp.float32)
    y = y + b2_ref[...]
    o_ref[...] = y.astype(o_ref.dtype)


def mlp_forward(x, w1, b1, w2, b2, *, compute_dtype=None, block_rows=256):
    """x: (B, D_in), w1: (D_in, H), b1: (1, H), w2: (H, D_out), b2: (1, D_out)."""
    B, d_in = x.shape
    H = w1.shape[1]
    d_out = w2.shape[1]
    out_dtype = x.dtype
    if compute_dtype is None:
        compute_dtype = x.dtype

    # --- lane-dense output: pad D_out up to a multiple of 128 ---------------------
    d_out_pad = max(128, pl.cdiv(d_out, 128) * 128)
    if d_out_pad != d_out:
        w2 = jnp.pad(w2, ((0, 0), (0, d_out_pad - d_out)))
        b2 = jnp.pad(b2, ((0, 0), (0, d_out_pad - d_out)))

    # --- dtype handling: matmul operands in compute_dtype, biases in f32 ----------
    xc = x.astype(compute_dtype)
    w1c = w1.astype(compute_dtype)
    w2c = w2.astype(compute_dtype)
    b1f = b1.astype(jnp.float32)
    b2f = b2.astype(jnp.float32)

    # --- batch tiling: full-extent single tile for small B, else 8-aligned tiles --
    tm = B if B <= block_rows else block_rows
    grid = (pl.cdiv(B, tm),)

    # --- advisory cost estimate ----------------------------------------------------
    itemsize_c = jnp.dtype(compute_dtype).itemsize
    itemsize_o = jnp.dtype(out_dtype).itemsize
    flops = 2 * B * (d_in * H + H * d_out_pad)
    bytes_accessed = (
        B * d_in * itemsize_c
        + (d_in * H + H * d_out_pad) * itemsize_c
        + (H + d_out_pad) * 4
        + B * d_out_pad * itemsize_o
    )
    cost = pl.CostEstimate(flops=flops, transcendentals=0,
                           bytes_accessed=bytes_accessed)

    # --- explicit VMEM budget (double-buffered streams + resident weights) --------
    budget = (
        2 * tm * d_in * itemsize_c            # x stream (2 buffers)
        + 2 * tm * d_out_pad * itemsize_o     # out stream (2 buffers)
        + 2 * (d_in * H + H * d_out_pad) * itemsize_c   # resident weights
        + 2 * (H + d_out_pad) * 4             # resident biases (f32)
        + 4 * tm * (H + d_out_pad) * 4        # f32 intermediates + headroom
    )
    vmem_limit = int(min(48 * 1024 * 1024, max(16 * 1024 * 1024, 2 * budget)))

    out_padded = pl.pallas_call(
        mlp_kernel,
        out_shape=jax.ShapeDtypeStruct((B, d_out_pad), out_dtype),
        grid=grid,
        in_specs=[
            pl.BlockSpec((tm, d_in), lambda i: (i, 0)),        # x: streamed per tile
            pl.BlockSpec((d_in, H), lambda i: (0, 0)),         # W1: resident
            pl.BlockSpec((1, H), lambda i: (0, 0)),            # b1: resident
            pl.BlockSpec((H, d_out_pad), lambda i: (0, 0)),    # W2: resident
            pl.BlockSpec((1, d_out_pad), lambda i: (0, 0)),    # b2: resident
        ],
        out_specs=pl.BlockSpec((tm, d_out_pad), lambda i: (i, 0)),
        compiler_params=pltpu.CompilerParams(
            dimension_semantics=("parallel",),
            vmem_limit_bytes=vmem_limit,
        ),
        cost_estimate=cost,
    )(xc, w1c, b1f, w2c, b2f)

    # Drop the lane-padding columns outside the kernel.
    return out_padded[:, :d_out]


def init_params(key, input_dim, hidden, output_dim, dtype=jnp.float32):
    """Deterministic init matching nn.Linear's uniform(-1/sqrt(fan_in), 1/sqrt(fan_in))."""
    k1, k2, k3, k4 = jax.random.split(key, 4)
    bound1 = 1.0 / (input_dim ** 0.5)
    bound2 = 1.0 / (hidden ** 0.5)
    # Stored as (in, out) — transpose of PyTorch's (out, in) layout.
    w1 = jax.random.uniform(k1, (input_dim, hidden), dtype, -bound1, bound1)
    b1 = jax.random.uniform(k2, (1, hidden), dtype, -bound1, bound1)
    w2 = jax.random.uniform(k3, (hidden, output_dim), dtype, -bound2, bound2)
    b2 = jax.random.uniform(k4, (1, output_dim), dtype, -bound2, bound2)
    return w1, b1, w2, b2


if __name__ == "__main__":
    # --- Config 1: regression head (output_dim=1), multiple batch tiles ------------
    batch, input_dim, hidden, output_dim = 512, 16, 32, 1
    key = jax.random.PRNGKey(0)
    kx, kp = jax.random.split(key)
    x = jax.random.normal(kx, (batch, input_dim), jnp.float32)
    w1, b1, w2, b2 = init_params(kp, input_dim, hidden, output_dim)

    ref = jnp.maximum(x @ w1 + b1, 0.0) @ w2 + b2

    # f32 path (default): bit-tight vs reference, grid of 4 batch tiles.
    out_f32 = jax.block_until_ready(
        mlp_forward(x, w1, b1, w2, b2, block_rows=128))
    assert out_f32.shape == (batch, output_dim)
    assert jnp.allclose(out_f32, ref, atol=1e-5, rtol=1e-5)

    # bf16 matmul path (fast MXU on v6e/v7x): looser tolerance vs the f32 reference.
    out_bf16 = jax.block_until_ready(
        mlp_forward(x, w1, b1, w2, b2, compute_dtype=jnp.bfloat16, block_rows=128))
    assert out_bf16.shape == (batch, output_dim)
    assert jnp.allclose(out_bf16, ref, atol=1e-1, rtol=1e-1)

    # --- Config 2: multiclass head (output_dim=10), single full-extent tile --------
    batch2, input_dim2, hidden2, output_dim2 = 64, 24, 32, 10
    kx2, kp2 = jax.random.split(jax.random.PRNGKey(1))
    x2 = jax.random.normal(kx2, (batch2, input_dim2), jnp.float32)
    p2 = init_params(kp2, input_dim2, hidden2, output_dim2)
    ref2 = jnp.maximum(x2 @ p2[0] + p2[1], 0.0) @ p2[2] + p2[3]

    out2 = jax.block_until_ready(mlp_forward(x2, *p2))
    assert out2.shape == (batch2, output_dim2)
    assert jnp.allclose(out2, ref2, atol=1e-5, rtol=1e-5)

    print("KERNEL_OK")
</pallas_src>

<mosaic_0001>
module attributes {stable_mosaic.version = 11 : i64} {
  func.func @mlp_kernel(%arg0: i32, %arg1: memref<128x16xf32, #tpu.memory_space<vmem>>, %arg2: memref<16x32xf32, #tpu.memory_space<vmem>>, %arg3: memref<1x32xf32, #tpu.memory_space<vmem>>, %arg4: memref<32x128xf32, #tpu.memory_space<vmem>>, %arg5: memref<1x128xf32, #tpu.memory_space<vmem>>, %arg6: memref<128x128xf32, #tpu.memory_space<vmem>>) attributes {dimension_semantics = [#tpu.dimension_semantics<parallel>], iteration_bounds = array<i64: 4>, scalar_prefetch = 0 : i64, scratch_operands = 0 : i64, tpu.core_type = #tpu.core_type<tc>, window_params = [{transform_indices = @transform_0, window_bounds = array<i64: 128, 16>}, {pipeline_mode = #tpu.pipeline_mode<synchronous>, transform_indices = @transform_1, window_bounds = array<i64: 16, 32>}, {pipeline_mode = #tpu.pipeline_mode<synchronous>, transform_indices = @transform_2, window_bounds = array<i64: 1, 32>}, {pipeline_mode = #tpu.pipeline_mode<synchronous>, transform_indices = @transform_3, window_bounds = array<i64: 32, 128>}, {pipeline_mode = #tpu.pipeline_mode<synchronous>, transform_indices = @transform_4, window_bounds = array<i64: 1, 128>}, {transform_indices = @transform_5, window_bounds = array<i64: 128, 128>}]} {
    %c0 = arith.constant 0 : index
    %c0_0 = arith.constant 0 : index
    %0 = vector.load %arg1[%c0, %c0_0] : memref<128x16xf32, #tpu.memory_space<vmem>>, vector<128x16xf32>
    %c0_1 = arith.constant 0 : index
    %c0_2 = arith.constant 0 : index
    %1 = vector.load %arg2[%c0_1, %c0_2] : memref<16x32xf32, #tpu.memory_space<vmem>>, vector<16x32xf32>
    %cst = arith.constant dense<0.000000e+00> : vector<128x32xf32>
    %2 = tpu.matmul %0, %1, %cst {dimension_numbers = #tpu.dot_dimension_numbers<[1], [0], [0], [1], [0, 0, 1, 1], [], []>} : vector<128x16xf32>, vector<16x32xf32>, vector<128x32xf32> -> vector<128x32xf32>
    %c0_3 = arith.constant 0 : index
    %c0_4 = arith.constant 0 : index
    %3 = vector.load %arg3[%c0_3, %c0_4] : memref<1x32xf32, #tpu.memory_space<vmem>>, vector<1x32xf32>
    %4 = vector.broadcast %3 : vector<1x32xf32> to vector<128x32xf32>
    %5 = arith.addf %2, %4 : vector<128x32xf32>
    %cst_5 = arith.constant 0.000000e+00 : f32
    %6 = vector.broadcast %cst_5 : f32 to vector<128x32xf32>
    %7 = arith.maximumf %5, %6 : vector<128x32xf32>
    %c0_6 = arith.constant 0 : index
    %c0_7 = arith.constant 0 : index
    %8 = vector.load %arg4[%c0_6, %c0_7] : memref<32x128xf32, #tpu.memory_space<vmem>>, vector<32x128xf32>
    %cst_8 = arith.constant dense<0.000000e+00> : vector<128x128xf32>
    %9 = tpu.matmul %7, %8, %cst_8 {dimension_numbers = #tpu.dot_dimension_numbers<[1], [0], [0], [1], [0, 0, 1, 1], [], []>} : vector<128x32xf32>, vector<32x128xf32>, vector<128x128xf32> -> vector<128x128xf32>
    %c0_9 = arith.constant 0 : index
    %c0_10 = arith.constant 0 : index
    %10 = vector.load %arg5[%c0_9, %c0_10] : memref<1x128xf32, #tpu.memory_space<vmem>>, vector<1x128xf32>
    %11 = vector.broadcast %10 : vector<1x128xf32> to vector<128x128xf32>
    %12 = arith.addf %9, %11 : vector<128x128xf32>
    %c0_11 = arith.constant 0 : index
    %c0_12 = arith.constant 0 : index
    %13 = vector.load %arg6[%c0_11, %c0_12] : memref<128x128xf32, #tpu.memory_space<vmem>>, vector<128x128xf32>
    tpu.vector_store %arg6[%c0_11, %c0_12], %12 {strides = array<i32>} : memref<128x128xf32, #tpu.memory_space<vmem>>, vector<128x128xf32>,
    return
  }
  func.func @transform_0(%arg0: i32) -> (i32, i32) {
    %c0_i32 = arith.constant 0 : i32
    %c0_i32_0 = arith.constant 0 : i32
    return %arg0, %c0_i32 : i32, i32
  }
  func.func @transform_1(%arg0: i32) -> (i32, i32) {
    %c0_i32 = arith.constant 0 : i32
    %c0_i32_0 = arith.constant 0 : i32
    %c0_i32_1 = arith.constant 0 : i32
    return %c0_i32, %c0_i32_0 : i32, i32
  }
  func.func @transform_2(%arg0: i32) -> (i32, i32) {
    %c0_i32 = arith.constant 0 : i32
    %c0_i32_0 = arith.constant 0 : i32
    %c0_i32_1 = arith.constant 0 : i32
    return %c0_i32, %c0_i32_0 : i32, i32
  }
  func.func @transform_3(%arg0: i32) -> (i32, i32) {
    %c0_i32 = arith.constant 0 : i32
    %c0_i32_0 = arith.constant 0 : i32
    %c0_i32_1 = arith.constant 0 : i32
    return %c0_i32, %c0_i32_0 : i32, i32
  }
  func.func @transform_4(%arg0: i32) -> (i32, i32) {
    %c0_i32 = arith.constant 0 : i32
    %c0_i32_0 = arith.constant 0 : i32
    %c0_i32_1 = arith.constant 0 : i32
    return %c0_i32, %c0_i32_0 : i32, i32
  }
  func.func @transform_5(%arg0: i32) -> (i32, i32) {
    %c0_i32 = arith.constant 0 : i32
    %c0_i32_0 = arith.constant 0 : i32
    return %arg0, %c0_i32 : i32, i32
  }
}

</mosaic_0001>

<llo_original>
// kernel: tpu_custom_call.1
$region0: #{tpu_custom_call.1}
  #allocation0 [shape = 'u32[]', space=smem, size = 0x4, offset = 0x4, fixed_abs, tag = 'smem constant byte address 0x4 - core index']
  #allocation1 [shape = 'u32[144,128]{1,0:T(1,128)}', space=vmem, size = 0x12000, scoped, tag = 'internal scratch']
  %s0 = inlined_call_operand.vmem [shape: f32[512,16], index: 0, kind: input, shape index: {}]
  %s1 = inlined_call_operand.vmem [shape: f32[16,32], index: 1, kind: input, shape index: {}]
  %s2 = inlined_call_operand.vmem [shape: f32[1,32], index: 2, kind: input, shape index: {}]
  %s3 = inlined_call_operand.vmem [shape: f32[32,128], index: 3, kind: input, shape index: {}]
  %s4 = inlined_call_operand.vmem [shape: f32[1,128], index: 4, kind: input, shape index: {}]
  %s5 = inlined_call_operand.hbm [shape: f32[512,128], index: 5, kind: output, shape index: {}]
  %s6 = sld [smem:[#allocation0]]
  $region53: #{tpu_custom_call.1} parent=0
    _
  %s8 = ssub.s32 1, %s6
  %s9 = scalar_select 0, %s8, %s6
  $region1: #{tpu_custom_call.1} parent=0
    #allocation2 [shape = 'u8[131072]{0}', space=vmem, size = 0x20000, scoped, tag = 'output window, operand 0']
    #allocation3 [shape = 's32[2]{0}', space=sflag, size = 0x8, scoped, tag = 'scoped memory for tpu_custom_call.1']
    %10 = vsyncpa [#allocation3], 0
    %s11 = scalar_lea.sflag [#allocation3], 1
    %12 = vsyncpa %s11, 0
    loop: start=0, step=1, limit=6
    $region2: #{tpu_custom_call.1} parent=1 // loop_pre_header
      _
    $region3: #{tpu_custom_call.1} parent=1 // loop_header
      %s14 = sphi 0, %s18
      %p15 = scmp.ge.s32.totalorder %s14, 6
      %s24 = sphi 0, %s26
      %s27 = sphi 0, %s24
      %s28 = sphi 0, %s27
      %s44 = sphi 0, %s28
      %s48 = sphi 0, %s48
      %s50 = sphi 0, %s48
      %s51 = sphi 0, %s50
      %s65 = sphi 0, %s51
      %s69 = sphi 0, %s69
      %s71 = sphi 0, %s69
      %s72 = sphi 0, %s71
      %s86 = sphi 0, %s72
      %s90 = sphi 0, %s90
      %s92 = sphi 0, %s90
      %s93 = sphi 0, %s92
      %s107 = sphi 0, %s93
      %s111 = sphi 0, %s111
      %s113 = sphi 0, %s111
      %s114 = sphi 0, %s113
      %s128 = sphi 0, %s114
      %s134 = sphi 0, %s136
      %s137 = sphi 0, %s134
      %s138 = sphi 0, %s137
      %s154 = sphi 0, %s138
    $region4: #{tpu_custom_call.1} parent=1 // loop_header_branch
      %17 = sbr.rel (%p15) target = $region8
    $region5: #{tpu_custom_call.1} parent=1 // loop_body
      %s19 = ssub.s32 %s14, 1
      %s20 = ssub.s32 %s14, 2
      %s21 = sadd.s32 %s14, 1
      %s22 = ssub.s32 %s14, %s21
      %p23 = scmp.eq.s32.totalorder %s22, 0
      %s25 = sadd.s32 %s24, 1
      %s26 = scalar_select %p23, %s24, %s25
      %p29 = pneg %p23
      %p30 = scmp.eq.s32.totalorder %s14, 3
      %p31 = por %p29, %p30
      %p32 = scmp.ne.s32.totalorder %s24, %s27
      %p33 = scmp.eq.s32.totalorder %s14, 0
      %p34 = por %p32, %p33
      %p35 = scmp.ne.s32.totalorder %s24, %s27
      %p36 = scmp.eq.s32.totalorder %s19, 3
      %p37 = por %p35, %p36
      %p38 = scmp.ne.s32.totalorder %s27, %s28
      %p39 = scmp.eq.s32.totalorder %s19, 0
      %p40 = por %p38, %p39
      %p41 = scmp.ne.s32.totalorder %s27, %s28
      %p42 = scmp.eq.s32.totalorder %s20, 3
      %p43 = por %p41, %p42
      %p45 = scmp.ne.s32.totalorder %s28, %s44
      %p46 = scmp.eq.s32.totalorder %s20, 0
      %p47 = por %p45, %p46
      %s49 = sadd.s32 %s48, 1
      %p52 = scmp.eq.s32.totalorder %s14, 3
      %p53 = scmp.ne.s32.totalorder %s48, %s50
      %p54 = scmp.eq.s32.totalorder %s14, 0
      %p55 = por %p53, %p54
      %p56 = scmp.ne.s32.totalorder %s48, %s50
      %p57 = scmp.eq.s32.totalorder %s19, 3
      %p58 = por %p56, %p57
      %p59 = scmp.ne.s32.totalorder %s50, %s51
      %p60 = scmp.eq.s32.totalorder %s19, 0
      %p61 = por %p59, %p60
      %p62 = scmp.ne.s32.totalorder %s50, %s51
      %p63 = scmp.eq.s32.totalorder %s20, 3
      %p64 = por %p62, %p63
      %p66 = scmp.ne.s32.totalorder %s51, %s65
      %p67 = scmp.eq.s32.totalorder %s20, 0
      %p68 = por %p66, %p67
      %s70 = sadd.s32 %s69, 1
      %p73 = scmp.eq.s32.totalorder %s14, 3
      %p74 = scmp.ne.s32.totalorder %s69, %s71
      %p75 = scmp.eq.s32.totalorder %s14, 0
      %p76 = por %p74, %p75
      %p77 = scmp.ne.s32.totalorder %s69, %s71
      %p78 = scmp.eq.s32.totalorder %s19, 3
      %p79 = por %p77, %p78
      %p80 = scmp.ne.s32.totalorder %s71, %s72
      %p81 = scmp.eq.s32.totalorder %s19, 0
      %p82 = por %p80, %p81
      %p83 = scmp.ne.s32.totalorder %s71, %s72
      %p84 = scmp.eq.s32.totalorder %s20, 3
      %p85 = por %p83, %p84
      %p87 = scmp.ne.s32.totalorder %s72, %s86
      %p88 = scmp.eq.s32.totalorder %s20, 0
      %p89 = por %p87, %p88
      %s91 = sadd.s32 %s90, 1
      %p94 = scmp.eq.s32.totalorder %s14, 3
      %p95 = scmp.ne.s32.totalorder %s90, %s92
      %p96 = scmp.eq.s32.totalorder %s14, 0
      %p97 = por %p95, %p96
      %p98 = scmp.ne.s32.totalorder %s90, %s92
      %p99 = scmp.eq.s32.totalorder %s19, 3
      %p100 = por %p98, %p99
      %p101 = scmp.ne.s32.totalorder %s92, %s93
      %p102 = scmp.eq.s32.totalorder %s19, 0
      %p103 = por %p101, %p102
      %p104 = scmp.ne.s32.totalorder %s92, %s93
      %p105 = scmp.eq.s32.totalorder %s20, 3
      %p106 = por %p104, %p105
      %p108 = scmp.ne.s32.totalorder %s93, %s107
      %p109 = scmp.eq.s32.totalorder %s20, 0
      %p110 = por %p108, %p109
      %s112 = sadd.s32 %s111, 1
      %p115 = scmp.eq.s32.totalorder %s14, 3
      %p116 = scmp.ne.s32.totalorder %s111, %s113
      %p117 = scmp.eq.s32.totalorder %s14, 0
      %p118 = por %p116, %p117
      %p119 = scmp.ne.s32.totalorder %s111, %s113
      %p120 = scmp.eq.s32.totalorder %s19, 3
      %p121 = por %p119, %p120
      %p122 = scmp.ne.s32.totalorder %s113, %s114
      %p123 = scmp.eq.s32.totalorder %s19, 0
      %p124 = por %p122, %p123
      %p125 = scmp.ne.s32.totalorder %s113, %s114
      %p126 = scmp.eq.s32.totalorder %s20, 3
      %p127 = por %p125, %p126
      %p129 = scmp.ne.s32.totalorder %s114, %s128
      %p130 = scmp.eq.s32.totalorder %s20, 0
      %p131 = por %p129, %p130
      %s132 = ssub.s32 %s14, %s21
      %p133 = scmp.eq.s32.totalorder %s132, 0
      %s135 = sadd.s32 %s134, 1
      %s136 = scalar_select %p133, %s134, %s135
      %p139 = pneg %p133
      %p140 = scmp.eq.s32.totalorder %s14, 3
      %p141 = por %p139, %p140
      %p142 = scmp.ne.s32.totalorder %s134, %s137
      %p143 = scmp.eq.s32.totalorder %s14, 0
      %p144 = por %p142, %p143
      %p145 = scmp.ne.s32.totalorder %s134, %s137
      %p146 = scmp.eq.s32.totalorder %s19, 3
      %p147 = por %p145, %p146
      %p148 = scmp.ne.s32.totalorder %s137, %s138
      %p149 = scmp.eq.s32.totalorder %s19, 0
      %p150 = por %p148, %p149
      %p151 = scmp.ne.s32.totalorder %s137, %s138
      %p152 = scmp.eq.s32.totalorder %s20, 3
      %p153 = por %p151, %p152
      %p155 = scmp.ne.s32.totalorder %s138, %s154
      %p156 = scmp.eq.s32.totalorder %s20, 0
      %p157 = por %p155, %p156
      %p158 = scmp.le.s32.totalorder 1, %s14
      %p159 = scmp.lt.s32.totalorder %s14, 5
      %p160 = pnand %p158, %p159
      %p161 = pneg %p160
      // Predicated region
      $region9: #{tpu_custom_call.1} parent=5 // pred_check
        _
      $region10: #{tpu_custom_call.1} parent=5 // pred_check_branch
        %163 = sbr.rel (%p160) target = $region12
      $region11: #{tpu_custom_call.1} parent=5 // pred_region
        %s164 = ssub.s32 %s14, 1
        // Predicated region
        $region13: #{tpu_custom_call.1} parent=11 // pred_check
          %p165 = pneg %p61
        $region14: #{tpu_custom_call.1} parent=11 // pred_check_branch
          %167 = sbr.rel (%p165) target = $region16
        $region15: #{tpu_custom_call.1} parent=11 // pred_region
          _
        $region16: #{tpu_custom_call.1} parent=11 // pred_fallthru
          _
        // Predicated region
        $region17: #{tpu_custom_call.1} parent=11 // pred_check
          %p168 = pneg %p82
        $region18: #{tpu_custom_call.1} parent=11 // pred_check_branch
          %170 = sbr.rel (%p168) target = $region20
        $region19: #{tpu_custom_call.1} parent=11 // pred_region
          _
        $region20: #{tpu_custom_call.1} parent=11 // pred_fallthru
          _
        // Predicated region
        $region21: #{tpu_custom_call.1} parent=11 // pred_check
          %p171 = pneg %p103
        $region22: #{tpu_custom_call.1} parent=11 // pred_check_branch
          %173 = sbr.rel (%p171) target = $region24
        $region23: #{tpu_custom_call.1} parent=11 // pred_region
          _
        $region24: #{tpu_custom_call.1} parent=11 // pred_fallthru
          _
        // Predicated region
        $region25: #{tpu_custom_call.1} parent=11 // pred_check
          %p174 = pneg %p124
        $region26: #{tpu_custom_call.1} parent=11 // pred_check_branch
          %176 = sbr.rel (%p174) target = $region28
        $region27: #{tpu_custom_call.1} parent=11 // pred_region
          _
        $region28: #{tpu_custom_call.1} parent=11 // pred_fallthru
          _
      $region12: #{tpu_custom_call.1} parent=5 // pred_fallthru
        _
      %p177 = scmp.lt.s32.totalorder %s14, 4
      // Predicated region
      $region29: #{tpu_custom_call.1} parent=5 // pred_check
        %p178 = pneg %p177
      $region30: #{tpu_custom_call.1} parent=5 // pred_check_branch
        %180 = sbr.rel (%p178) target = $region32
      $region31: #{tpu_custom_call.1} parent=5 // pred_region
        // Predicated region
        $region33: #{tpu_custom_call.1} parent=31 // pred_check
          %p181 = pneg %p34
        $region34: #{tpu_custom_call.1} parent=31 // pred_check_branch
          %183 = sbr.rel (%p181) target = $region36
        $region35: #{tpu_custom_call.1} parent=31 // pred_region
          %s184 = smul.u32 16, %s14
          %p185 = scmp.lt.s32.totalorder %s184, 63
          %s186 = scalar_select %p185, %s184, 63
          %s187 = smul.addr %s186, 8
          %s188 = scalar_lea.vmem %s0, %s187
          %s189 = smul.u32 16, %s14
        $region36: #{tpu_custom_call.1} parent=31 // pred_fallthru
          _
      $region32: #{tpu_custom_call.1} parent=5 // pred_fallthru
        _
      %p190 = scmp.le.s32.totalorder 1, %s14
      %p191 = scmp.lt.s32.totalorder %s14, 5
      %p192 = pnand %p190, %p191
      %p193 = pneg %p192
      // Predicated region
      $region37: #{tpu_custom_call.1} parent=5 // pred_check
        _
      $region38: #{tpu_custom_call.1} parent=5 // pred_check_branch
        %195 = sbr.rel (%p192) target = $region40
      $region39: #{tpu_custom_call.1} parent=5 // pred_region
        %s196 = ssub.s32 %s14, 1
        %s197 = smul.u32 16, %s19
        %p198 = scmp.lt.s32.totalorder %s197, 63
        %s199 = scalar_select %p198, %s197, 63
        %s200 = smul.addr %s199, 8
        %s201 = scalar_lea.vmem %s0, %s200
        %p202 = pneg %p40
        %p203 = pneg %p37
        %p204 = pneg %p61
        %p205 = pneg %p58
        %p206 = pneg %p82
        %p207 = pneg %p79
        %p208 = pneg %p103
        %p209 = pneg %p100
        %p210 = pneg %p124
        %p211 = pneg %p121
        %p212 = pneg %p150
        %p213 = pneg %p147
        %s214 = sand.u32 %s137, 1
        %s215 = scalar_lea.sflag [#allocation3], %s214
        %s216 = sand.u32 %s137, 1
        %s217 = smul.addr %s216, 128
        %s218 = scalar_lea.vmem [#allocation2], %s217
        %s219 = smul.u32 16, %s19
        %p220 = scmp.lt.s32.totalorder %s219, 63
        %s221 = scalar_select %p220, %s219, 63
        %s222 = smul.addr %s221, 8
        %s223 = scalar_lea.vmem %s0, %s222
        %s224 = smul.u32 16, %s19
        %s225 = smul.u32 16, %s19
        %v226 = vld [vmem:[%s223] sm:$0xff]
        %v227 = vld [vmem:[%s223 + $0x8] sm:$0xff]
        %v228 = vld [vmem:[%s223 + $0x10] sm:$0xff]
        %v229 = vld [vmem:[%s223 + $0x18] sm:$0xff]
        %v230 = vld [vmem:[%s223 + $0x20] sm:$0xff]
        %v231 = vld [vmem:[%s223 + $0x28] sm:$0xff]
        %v232 = vld [vmem:[%s223 + $0x30] sm:$0xff]
        %v233 = vld [vmem:[%s223 + $0x38] sm:$0xff]
        %v234 = vld [vmem:[%s223 + $0x40] sm:$0xff]
        %v235 = vld [vmem:[%s223 + $0x48] sm:$0xff]
        %v236 = vld [vmem:[%s223 + $0x50] sm:$0xff]
        %v237 = vld [vmem:[%s223 + $0x58] sm:$0xff]
        %v238 = vld [vmem:[%s223 + $0x60] sm:$0xff]
        %v239 = vld [vmem:[%s223 + $0x68] sm:$0xff]
        %v240 = vld [vmem:[%s223 + $0x70] sm:$0xff]
        %v241 = vld [vmem:[%s223 + $0x78] sm:$0xff]
        %v242 = vld [vmem:[%s1] sm:$0xff]
        %v243 = vld [vmem:[%s1 + $0x8] sm:$0xff]
        %v244 = vld [vmem:[%s2] sm:$0x1]
        %v246 = vlaneseq
        %v247 = vshrl.u32 %v246, 7
        %v248 = vsub.s32 0, %v247
        %v249 = vrot.slane %v244, %v248
        %vm251 = vcmask 130048
        %v253 = vsel %vm251, %v226, 0
        %v256 = vsel %vm251, %v227, 0
        %v259 = vsel %vm251, %v228, 0
        %v262 = vsel %vm251, %v229, 0
        %v265 = vsel %vm251, %v230, 0
        %v268 = vsel %vm251, %v231, 0
        %v271 = vsel %vm251, %v232, 0
        %v274 = vsel %vm251, %v233, 0
        %v277 = vsel %vm251, %v234, 0
        %v280 = vsel %vm251, %v235, 0
        %v283 = vsel %vm251, %v236, 0
        %v286 = vsel %vm251, %v237, 0
        %v289 = vsel %vm251, %v238, 0
        %v292 = vsel %vm251, %v239, 0
        %v295 = vsel %vm251, %v240, 0
        %v298 = vsel %vm251, %v241, 0
        %300 = vmatprep.subr.mxu0 0.0
        %301 = vmatpush1.msra.mxu0 0.0
        %302 = vmatprep.subr.mxu0 0.0
        %303 = vmatpush1.msra.mxu0 0.0
        %304 = vmatprep.subr.mxu0 0.0
        %305 = vmatpush1.msra.mxu0 0.0
        %306 = vmatprep.subr.mxu0 0.0
        %307 = vmatpush1.msra.mxu0 0.0
        %308 = vmatprep.subr.mxu0 0.0
        %309 = vmatpush1.msra.mxu0 0.0
        %310 = vmatprep.subr.mxu0 0.0
        %311 = vmatpush1.msra.mxu0 0.0
        %312 = vmatprep.subr.mxu0 0.0
        %313 = vmatpush1.msra.mxu0 0.0
        %314 = vmatprep.subr.mxu0 0.0
        %315 = vmatpush1.msra.mxu0 0.0
        %316 = vmatprep.subr.mxu0 0.0
        %317 = vmatpush1.msra.mxu0 0.0
        %318 = vmatprep.subr.mxu0 0.0
        %319 = vmatpush1.msra.mxu0 0.0
        %320 = vmatprep.subr.mxu0 0.0
        %321 = vmatpush1.msra.mxu0 0.0
        %322 = vmatprep.subr.mxu0 0.0
        %323 = vmatpush1.msra.mxu0 0.0
        %324 = vmatprep.subr.mxu0 0.0
        %325 = vmatpush1.msra.mxu0 0.0
        %326 = vmatprep.subr.mxu0 0.0
        %327 = vmatpush1.msra.mxu0 0.0
        %328 = vmatprep.subr.mxu0 0.0
        %329 = vmatpush1.msra.mxu0 %v243
        %330 = vmatprep.subr.mxu0 0.0
        %331 = vmatpush1.msra.mxu0 %v242
        %332 = vmatprep.subr.mxu0 0.0
        %333 = vmatpush2.msra.mxu0 0.0
        %334 = vmatprep.subr.mxu0 0.0
        %335 = vmatpush2.msra.mxu0 0.0
        %336 = vmatprep.subr.mxu0 0.0
        %337 = vmatpush2.msra.mxu0 0.0
        %338 = vmatprep.subr.mxu0 0.0
        %339 = vmatpush2.msra.mxu0 0.0
        %340 = vmatprep.subr.mxu0 0.0
        %341 = vmatpush2.msra.mxu0 0.0
        %342 = vmatprep.subr.mxu0 0.0
        %343 = vmatpush2.msra.mxu0 0.0
        %344 = vmatprep.subr.mxu0 0.0
        %345 = vmatpush2.msra.mxu0 0.0
        %346 = vmatprep.subr.mxu0 0.0
        %347 = vmatpush2.msra.mxu0 0.0
        %348 = vmatprep.subr.mxu0 0.0
        %349 = vmatpush2.msra.mxu0 0.0
        %350 = vmatprep.subr.mxu0 0.0
        %351 = vmatpush2.msra.mxu0 0.0
        %352 = vmatprep.subr.mxu0 0.0
        %353 = vmatpush2.msra.mxu0 0.0
        %354 = vmatprep.subr.mxu0 0.0
        %355 = vmatpush2.msra.mxu0 0.0
        %356 = vmatprep.subr.mxu0 0.0
        %357 = vmatpush2.msra.mxu0 0.0
        %358 = vmatprep.subr.mxu0 0.0
        %359 = vmatpush2.msra.mxu0 0.0
        %360 = vmatprep.subr.mxu0 0.0
        %361 = vmatpush2.msra.mxu0 0.0
        %362 = vmatprep.subr.mxu0 0.0
        %363 = vmatpush2.msra.mxu0 0.0
        %364 = vmatprep.mubr.f32.mxu0 0.0
        %365 = vmatmul.mubr.f32.gmra.mxu0 %v253
        %v366 = vpop.f32.mrf.mxu0
        %v367 = vadd.f32 %v249, %v366
        %v368 = vpop.f32.mrf.mxu0
        %369 = vmatprep.mubr.f32.mxu0 0.0
        %370 = vmatmul.mubr.f32.gmra.mxu0 %v256
        %v371 = vpop.f32.mrf.mxu0
        %v372 = vadd.f32 %v249, %v371
        %v373 = vpop.f32.mrf.mxu0
        %374 = vmatprep.mubr.f32.mxu0 0.0
        %375 = vmatmul.mubr.f32.gmra.mxu0 %v259
        %v376 = vpop.f32.mrf.mxu0
        %v377 = vadd.f32 %v249, %v376
        %v378 = vpop.f32.mrf.mxu0
        %379 = vmatprep.mubr.f32.mxu0 0.0
        %380 = vmatmul.mubr.f32.gmra.mxu0 %v262
        %v381 = vpop.f32.mrf.mxu0
        %v382 = vadd.f32 %v249, %v381
        %v383 = vpop.f32.mrf.mxu0
        %384 = vmatprep.mubr.f32.mxu0 0.0
        %385 = vmatmul.mubr.f32.gmra.mxu0 %v265
        %v386 = vpop.f32.mrf.mxu0
        %v387 = vadd.f32 %v249, %v386
        %v388 = vpop.f32.mrf.mxu0
        %389 = vmatprep.mubr.f32.mxu0 0.0
        %390 = vmatmul.mubr.f32.gmra.mxu0 %v268
        %v391 = vpop.f32.mrf.mxu0
        %v392 = vadd.f32 %v249, %v391
        %v393 = vpop.f32.mrf.mxu0
        %394 = vmatprep.mubr.f32.mxu0 0.0
        %395 = vmatmul.mubr.f32.gmra.mxu0 %v271
        %v396 = vpop.f32.mrf.mxu0
        %v397 = vadd.f32 %v249, %v396
        %v398 = vpop.f32.mrf.mxu0
        %399 = vmatprep.mubr.f32.mxu0 0.0
        %400 = vmatmul.mubr.f32.gmra.mxu0 %v274
        %v401 = vpop.f32.mrf.mxu0
        %v402 = vadd.f32 %v249, %v401
        %v403 = vpop.f32.mrf.mxu0
        %404 = vmatprep.mubr.f32.mxu0 0.0
        %405 = vmatmul.mubr.f32.gmra.mxu0 %v277
        %v406 = vpop.f32.mrf.mxu0
        %v407 = vadd.f32 %v249, %v406
        %v408 = vpop.f32.mrf.mxu0
        %409 = vmatprep.mubr.f32.mxu0 0.0
        %410 = vmatmul.mubr.f32.gmra.mxu0 %v280
        %v411 = vpop.f32.mrf.mxu0
        %v412 = vadd.f32 %v249, %v411
        %v413 = vpop.f32.mrf.mxu0
        %414 = vmatprep.mubr.f32.mxu0 0.0
        %415 = vmatmul.mubr.f32.gmra.mxu0 %v283
        %v416 = vpop.f32.mrf.mxu0
        %v417 = vadd.f32 %v249, %v416
        %v418 = vpop.f32.mrf.mxu0
        %419 = vmatprep.mubr.f32.mxu0 0.0
        %420 = vmatmul.mubr.f32.gmra.mxu0 %v286
        %v421 = vpop.f32.mrf.mxu0
        %v422 = vadd.f32 %v249, %v421
        %v423 = vpop.f32.mrf.mxu0
        %424 = vmatprep.mubr.f32.mxu0 0.0
        %425 = vmatmul.mubr.f32.gmra.mxu0 %v289
        %v426 = vpop.f32.mrf.mxu0
        %v427 = vadd.f32 %v249, %v426
        %v428 = vpop.f32.mrf.mxu0
        %429 = vmatprep.mubr.f32.mxu0 0.0
        %430 = vmatmul.mubr.f32.gmra.mxu0 %v292
        %v431 = vpop.f32.mrf.mxu0
        %v432 = vadd.f32 %v249, %v431
        %v433 = vpop.f32.mrf.mxu0
        %434 = vmatprep.mubr.f32.mxu0 0.0
        %435 = vmatmul.mubr.f32.gmra.mxu0 %v295
        %v436 = vpop.f32.mrf.mxu0
        %v437 = vadd.f32 %v249, %v436
        %v438 = vpop.f32.mrf.mxu0
        %439 = vmatprep.mubr.f32.mxu0 0.0
        %440 = vmatmul.mubr.f32.gmra.mxu0 %v298
        %v441 = vpop.f32.mrf.mxu0
        %v442 = vadd.f32 %v249, %v441
        %v443 = vpop.f32.mrf.mxu0
        %444 = vdwg.mxu0
        %v445 = vmax.f32 %v367, 0.0
        %v446 = vmax.f32 %v372, 0.0
        %v447 = vmax.f32 %v377, 0.0
        %v448 = vmax.f32 %v382, 0.0
        %v449 = vmax.f32 %v387, 0.0
        %v450 = vmax.f32 %v392, 0.0
        %v451 = vmax.f32 %v397, 0.0
        %v452 = vmax.f32 %v402, 0.0
        %v453 = vmax.f32 %v407, 0.0
        %v454 = vmax.f32 %v412, 0.0
        %v455 = vmax.f32 %v417, 0.0
        %v456 = vmax.f32 %v422, 0.0
        %v457 = vmax.f32 %v427, 0.0
        %v458 = vmax.f32 %v432, 0.0
        %v459 = vmax.f32 %v437, 0.0
        %v460 = vmax.f32 %v442, 0.0
        %v461 = vld [vmem:[%s3] sm:$0xff]
        %v462 = vld [vmem:[%s3 + $0x8] sm:$0xff]
        %v463 = vld [vmem:[%s3 + $0x10] sm:$0xff]
        %v464 = vld [vmem:[%s3 + $0x18] sm:$0xff]
        %v465 = vld [vmem:[%s4] sm:$0x1]
        %v467 = vlaneseq
        %v468 = vshrl.u32 %v467, 7
        %v469 = vsub.s32 0, %v468
        %v470 = vrot.slane %v465, %v469
        %vm472 = vcmask 261120
        %v474 = vsel %vm472, %v445, 0
        %v477 = vsel %vm472, %v446, 0
        %v480 = vsel %vm472, %v447, 0
        %v483 = vsel %vm472, %v448, 0
        %v486 = vsel %vm472, %v449, 0
        %v489 = vsel %vm472, %v450, 0
        %v492 = vsel %vm472, %v451, 0
        %v495 = vsel %vm472, %v452, 0
        %v498 = vsel %vm472, %v453, 0
        %v501 = vsel %vm472, %v454, 0
        %v504 = vsel %vm472, %v455, 0
        %v507 = vsel %vm472, %v456, 0
        %v510 = vsel %vm472, %v457, 0
        %v513 = vsel %vm472, %v458, 0
        %v516 = vsel %vm472, %v459, 0
        %v519 = vsel %vm472, %v460, 0
        %521 = vmatprep.subr.mxu0 0.0
        %522 = vmatpush1.msra.mxu0 0.0
        %523 = vmatprep.subr.mxu0 0.0
        %524 = vmatpush1.msra.mxu0 0.0
        %525 = vmatprep.subr.mxu0 0.0
        %526 = vmatpush1.msra.mxu0 0.0
        %527 = vmatprep.subr.mxu0 0.0
        %528 = vmatpush1.msra.mxu0 0.0
        %529 = vmatprep.subr.mxu0 0.0
        %530 = vmatpush1.msra.mxu0 0.0
        %531 = vmatprep.subr.mxu0 0.0
        %532 = vmatpush1.msra.mxu0 0.0
        %533 = vmatprep.subr.mxu0 0.0
        %534 = vmatpush1.msra.mxu0 0.0
        %535 = vmatprep.subr.mxu0 0.0
        %536 = vmatpush1.msra.mxu0 0.0
        %537 = vmatprep.subr.mxu0 0.0
        %538 = vmatpush1.msra.mxu0 0.0
        %539 = vmatprep.subr.mxu0 0.0
        %540 = vmatpush1.msra.mxu0 0.0
        %541 = vmatprep.subr.mxu0 0.0
        %542 = vmatpush1.msra.mxu0 0.0
        %543 = vmatprep.subr.mxu0 0.0
        %544 = vmatpush1.msra.mxu0 0.0
        %545 = vmatprep.subr.mxu0 0.0
        %546 = vmatpush1.msra.mxu0 %v464
        %547 = vmatprep.subr.mxu0 0.0
        %548 = vmatpush1.msra.mxu0 %v463
        %549 = vmatprep.subr.mxu0 0.0
        %550 = vmatpush1.msra.mxu0 %v462
        %551 = vmatprep.subr.mxu0 0.0
        %552 = vmatpush1.msra.mxu0 %v461
        %553 = vmatprep.subr.mxu0 0.0
        %554 = vmatpush2.msra.mxu0 0.0
        %555 = vmatprep.subr.mxu0 0.0
        %556 = vmatpush2.msra.mxu0 0.0
        %557 = vmatprep.subr.mxu0 0.0
        %558 = vmatpush2.msra.mxu0 0.0
        %559 = vmatprep.subr.mxu0 0.0
        %560 = vmatpush2.msra.mxu0 0.0
        %561 = vmatprep.subr.mxu0 0.0
        %562 = vmatpush2.msra.mxu0 0.0
        %563 = vmatprep.subr.mxu0 0.0
        %564 = vmatpush2.msra.mxu0 0.0
        %565 = vmatprep.subr.mxu0 0.0
        %566 = vmatpush2.msra.mxu0 0.0
        %567 = vmatprep.subr.mxu0 0.0
        %568 = vmatpush2.msra.mxu0 0.0
        %569 = vmatprep.subr.mxu0 0.0
        %570 = vmatpush2.msra.mxu0 0.0
        %571 = vmatprep.subr.mxu0 0.0
        %572 = vmatpush2.msra.mxu0 0.0
        %573 = vmatprep.subr.mxu0 0.0
        %574 = vmatpush2.msra.mxu0 0.0
        %575 = vmatprep.subr.mxu0 0.0
        %576 = vmatpush2.msra.mxu0 0.0
        %577 = vmatprep.subr.mxu0 0.0
        %578 = vmatpush2.msra.mxu0 0.0
        %579 = vmatprep.subr.mxu0 0.0
        %580 = vmatpush2.msra.mxu0 0.0
        %581 = vmatprep.subr.mxu0 0.0
        %582 = vmatpush2.msra.mxu0 0.0
        %583 = vmatprep.subr.mxu0 0.0
        %584 = vmatpush2.msra.mxu0 0.0
        %585 = vmatprep.mubr.f32.mxu0 0.0
        %586 = vmatmul.mubr.f32.gmra.mxu0 %v474
        %v587 = vpop.f32.mrf.mxu0
        %v588 = vadd.f32 %v470, %v587
        %v589 = vpop.f32.mrf.mxu0
        %590 = vmatprep.mubr.f32.mxu0 0.0
        %591 = vmatmul.mubr.f32.gmra.mxu0 %v477
        %v592 = vpop.f32.mrf.mxu0
        %v593 = vadd.f32 %v470, %v592
        %v594 = vpop.f32.mrf.mxu0
        %595 = vmatprep.mubr.f32.mxu0 0.0
        %596 = vmatmul.mubr.f32.gmra.mxu0 %v480
        %v597 = vpop.f32.mrf.mxu0
        %v598 = vadd.f32 %v470, %v597
        %v599 = vpop.f32.mrf.mxu0
        %600 = vmatprep.mubr.f32.mxu0 0.0
        %601 = vmatmul.mubr.f32.gmra.mxu0 %v483
        %v602 = vpop.f32.mrf.mxu0
        %v603 = vadd.f32 %v470, %v602
        %v604 = vpop.f32.mrf.mxu0
        %605 = vmatprep.mubr.f32.mxu0 0.0
        %606 = vmatmul.mubr.f32.gmra.mxu0 %v486
        %v607 = vpop.f32.mrf.mxu0
        %v608 = vadd.f32 %v470, %v607
        %v609 = vpop.f32.mrf.mxu0
        %610 = vmatprep.mubr.f32.mxu0 0.0
        %611 = vmatmul.mubr.f32.gmra.mxu0 %v489
        %v612 = vpop.f32.mrf.mxu0
        %v613 = vadd.f32 %v470, %v612
        %v614 = vpop.f32.mrf.mxu0
        %615 = vmatprep.mubr.f32.mxu0 0.0
        %616 = vmatmul.mubr.f32.gmra.mxu0 %v492
        %v617 = vpop.f32.mrf.mxu0
        %v618 = vadd.f32 %v470, %v617
        %v619 = vpop.f32.mrf.mxu0
        %620 = vmatprep.mubr.f32.mxu0 0.0
        %621 = vmatmul.mubr.f32.gmra.mxu0 %v495
        %v622 = vpop.f32.mrf.mxu0
        %v623 = vadd.f32 %v470, %v622
        %v624 = vpop.f32.mrf.mxu0
        %625 = vmatprep.mubr.f32.mxu0 0.0
        %626 = vmatmul.mubr.f32.gmra.mxu0 %v498
        %v627 = vpop.f32.mrf.mxu0
        %v628 = vadd.f32 %v470, %v627
        %v629 = vpop.f32.mrf.mxu0
        %630 = vmatprep.mubr.f32.mxu0 0.0
        %631 = vmatmul.mubr.f32.gmra.mxu0 %v501
        %v632 = vpop.f32.mrf.mxu0
        %v633 = vadd.f32 %v470, %v632
        %v634 = vpop.f32.mrf.mxu0
        %635 = vmatprep.mubr.f32.mxu0 0.0
        %636 = vmatmul.mubr.f32.gmra.mxu0 %v504
        %v637 = vpop.f32.mrf.mxu0
        %v638 = vadd.f32 %v470, %v637
        %v639 = vpop.f32.mrf.mxu0
        %640 = vmatprep.mubr.f32.mxu0 0.0
        %641 = vmatmul.mubr.f32.gmra.mxu0 %v507
        %v642 = vpop.f32.mrf.mxu0
        %v643 = vadd.f32 %v470, %v642
        %v644 = vpop.f32.mrf.mxu0
        %645 = vmatprep.mubr.f32.mxu0 0.0
        %646 = vmatmul.mubr.f32.gmra.mxu0 %v510
        %v647 = vpop.f32.mrf.mxu0
        %v648 = vadd.f32 %v470, %v647
        %v649 = vpop.f32.mrf.mxu0
        %650 = vmatprep.mubr.f32.mxu0 0.0
        %651 = vmatmul.mubr.f32.gmra.mxu0 %v513
        %v652 = vpop.f32.mrf.mxu0
        %v653 = vadd.f32 %v470, %v652
        %v654 = vpop.f32.mrf.mxu0
        %655 = vmatprep.mubr.f32.mxu0 0.0
        %656 = vmatmul.mubr.f32.gmra.mxu0 %v516
        %v657 = vpop.f32.mrf.mxu0
        %v658 = vadd.f32 %v470, %v657
        %v659 = vpop.f32.mrf.mxu0
        %660 = vmatprep.mubr.f32.mxu0 0.0
        %661 = vmatmul.mubr.f32.gmra.mxu0 %v519
        %v662 = vpop.f32.mrf.mxu0
        %v663 = vadd.f32 %v470, %v662
        %v664 = vpop.f32.mrf.mxu0
        %665 = vdwg.mxu0
        %666 = vst [vmem:[%s218] sm:$0xff] %v588
        %667 = vst [vmem:[%s218 + $0x8] sm:$0xff] %v593
        %668 = vst [vmem:[%s218 + $0x10] sm:$0xff] %v598
        %669 = vst [vmem:[%s218 + $0x18] sm:$0xff] %v603
        %670 = vst [vmem:[%s218 + $0x20] sm:$0xff] %v608
        %671 = vst [vmem:[%s218 + $0x28] sm:$0xff] %v613
        %672 = vst [vmem:[%s218 + $0x30] sm:$0xff] %v618
        %673 = vst [vmem:[%s218 + $0x38] sm:$0xff] %v623
        %674 = vst [vmem:[%s218 + $0x40] sm:$0xff] %v628
        %675 = vst [vmem:[%s218 + $0x48] sm:$0xff] %v633
        %676 = vst [vmem:[%s218 + $0x50] sm:$0xff] %v638
        %677 = vst [vmem:[%s218 + $0x58] sm:$0xff] %v643
        %678 = vst [vmem:[%s218 + $0x60] sm:$0xff] %v648
        %679 = vst [vmem:[%s218 + $0x68] sm:$0xff] %v653
        %680 = vst [vmem:[%s218 + $0x70] sm:$0xff] %v658
        %681 = vst [vmem:[%s218 + $0x78] sm:$0xff] %v663
        %s682 = sand.u32 %s137, 1
        %s683 = scalar_lea.sflag [#allocation3], %s682
        %s684 = sand.u32 %s137, 1
        %s685 = smul.addr %s684, 128
        %s686 = scalar_lea.vmem [#allocation2], %s685
        // Predicated region
        $region41: #{tpu_custom_call.1} parent=39 // pred_check
          %p687 = pneg %p147
        $region42: #{tpu_custom_call.1} parent=39 // pred_check_branch
          %689 = sbr.rel (%p687) target = $region44
        $region43: #{tpu_custom_call.1} parent=39 // pred_region
          %s690 = smul.u32 16, %s19
          %s692 = ssub.s32 2048, 2048
          %693 = vsyncadd %s683, %s692
          %s694 = smul.addr %s690, 128
          %s695 = scalar_lea.hbm %s5, %s694
          %s696 = sshll.u32 %s686, 4
          %s697 = int_to_ptr.vmem [resolvable:$true] %s696
          %702 = dma.vmem_to_hbm [thread:$0]  %s697, 2048, %s695, %s683, 128, 128, 8
        $region44: #{tpu_custom_call.1} parent=39 // pred_fallthru
          _
      $region40: #{tpu_custom_call.1} parent=5 // pred_fallthru
        _
      %p703 = scmp.le.s32.totalorder 2, %s14
      // Predicated region
      $region45: #{tpu_custom_call.1} parent=5 // pred_check
        %p704 = pneg %p703
      $region46: #{tpu_custom_call.1} parent=5 // pred_check_branch
        %706 = sbr.rel (%p704) target = $region48
      $region47: #{tpu_custom_call.1} parent=5 // pred_region
        %s707 = ssub.s32 %s14, 2
        // Predicated region
        $region49: #{tpu_custom_call.1} parent=47 // pred_check
          %p708 = pneg %p153
        $region50: #{tpu_custom_call.1} parent=47 // pred_check_branch
          %710 = sbr.rel (%p708) target = $region52
        $region51: #{tpu_custom_call.1} parent=47 // pred_region
          %s711 = sand.u32 %s138, 1
          %s712 = scalar_lea.sflag [#allocation3], %s711
          %s713 = sand.u32 %s138, 1
          %s714 = smul.addr %s713, 128
          %s715 = scalar_lea.vmem [#allocation2], %s714
          %716 = dma.done %s712, 2048
        $region52: #{tpu_custom_call.1} parent=47 // pred_fallthru
          _
      $region48: #{tpu_custom_call.1} parent=5 // pred_fallthru
        _
    $region6: #{tpu_custom_call.1} parent=1 // loop_footer
      %s18 = sadd.s32 1, %s14
    $region7: #{tpu_custom_call.1} parent=1 // loop_footer_branch
      %13 = sbr.rel target = $region3
    $region8: #{tpu_custom_call.1} parent=1 // loop_exit
      _
    %717 = vsyncpa [#allocation3], 1
    %s718 = scalar_lea.sflag [#allocation3], 1
    %719 = vsyncpa %s718, 1

</llo_original>
